<compile_context>
chip_gen: v7x
topology: tpu7x:2x2x1
jax: 0.10.0
libtpu: 0.0.40
codegen_flags: <defaults>
</compile_context>

<pallas_src>
import functools

import jax
import jax.numpy as jnp
from jax import lax
from jax.experimental import pallas as pl
from jax.experimental.pallas import tpu as pltpu

_LANES = 128


def _poe_loss_kernel(x_ref, y_ref, t_ref, o_ref, *, poe_alpha, total_batch,
                     block_b):
    i = pl.program_id(0)

    x = x_ref[...].astype(jnp.float32)          # (TB, C) clean logits
    y = y_ref[...].astype(jnp.float32)          # (TB, C) adversary logits
    tgt = t_ref[...]                            # (TB, 1) int32

    # Single-pass PoE: z = x + alpha*y; loss_i = logsumexp(z_i) - z[i, t_i].
    z = x + poe_alpha * y                       # (TB, C)
    z_max = jnp.max(z, axis=1, keepdims=True)
    lse = z_max + jnp.log(jnp.sum(jnp.exp(z - z_max), axis=1, keepdims=True))

    tb, c = z.shape
    col_ids = lax.broadcasted_iota(jnp.int32, (tb, c), 1)
    picked = jnp.sum(jnp.where(col_ids == tgt, z, 0.0), axis=1, keepdims=True)

    per_row = lse - picked                      # (TB, 1) per-row NLL

    # Mask padded rows of the (possibly ragged) last batch tile.
    row_ids = lax.broadcasted_iota(jnp.int32, (tb, 1), 0) + i * block_b
    per_row = jnp.where(row_ids < total_batch, per_row, 0.0)

    block_loss = jnp.sum(per_row)               # scalar partial for this tile

    # Lane-dense per-block partial: value at lane 0, zeros elsewhere.
    lane_ids = lax.broadcasted_iota(jnp.int32, (1, _LANES), 1)
    o_ref[...] = jnp.where(lane_ids == 0, block_loss, 0.0)


def _choose_block_b(batch, classes, itemsize, vmem_budget_bytes=8 << 20):
    """Largest batch tile (<=512, multiple of 8) whose double-buffered input
    footprint (2 logit arrays x 2 pipeline buffers) stays within budget on all
    generations (budget kept well under the v7x 32 MiB scoped default)."""
    per_row_bytes = 2 * 2 * classes * max(itemsize, 1)
    bb = vmem_budget_bytes // per_row_bytes
    bb = int(max(8, min(512, bb)))
    bb = max(8, (bb // 8) * 8)
    if batch <= bb:
        return batch                            # one full-array tile
    return bb


def poe_loss(inputs, targets, inputs_adv, *, poe_alpha=1.0, size_average=True,
             block_b=None):
    """Pallas TPU implementation of POELoss.forward (default config).

    inputs, inputs_adv: (B, C) float logits (f32 or bf16).
    targets:            (B,) integer class ids.
    Returns a scalar float32 loss.
    """
    # TODO(synk): ensemble_training / inputs_adv_is_prob branches not wired in
    # (default POELoss config only).
    B, C = inputs.shape
    assert inputs_adv.shape == (B, C)
    if block_b is None:
        block_b = _choose_block_b(B, C, jnp.dtype(inputs.dtype).itemsize)
    nb = pl.cdiv(B, block_b)
    targets_2d = targets.reshape(B, 1).astype(jnp.int32)

    kernel = functools.partial(
        _poe_loss_kernel,
        poe_alpha=float(poe_alpha),
        total_batch=B,
        block_b=block_b,
    )

    partials = pl.pallas_call(
        kernel,
        out_shape=jax.ShapeDtypeStruct((1, nb * _LANES), jnp.float32),
        grid_spec=pltpu.PrefetchScalarGridSpec(
            num_scalar_prefetch=0,
            grid=(nb,),
            in_specs=[
                pl.BlockSpec((block_b, C), lambda i: (i, 0)),  # inputs
                pl.BlockSpec((block_b, C), lambda i: (i, 0)),  # inputs_adv
                pl.BlockSpec((block_b, 1), lambda i: (i, 0)),  # targets
            ],
            out_specs=pl.BlockSpec((1, _LANES), lambda i: (0, i)),
        ),
        compiler_params=pltpu.CompilerParams(
            dimension_semantics=("parallel",),  # independent per-block partials
        ),
    )(inputs, inputs_adv, targets_2d)

    total = jnp.sum(partials)
    if size_average:
        return total / jnp.float32(B)
    return total


def _poe_loss_ref(inputs, targets, inputs_adv, *, poe_alpha=1.0,
                  size_average=True):
    """Pure-JAX reference mirroring the PyTorch module (3-pass formulation)."""
    log_pt = jax.nn.log_softmax(inputs.astype(jnp.float32), axis=1)
    log_pt_adv = jax.nn.log_softmax(inputs_adv.astype(jnp.float32), axis=1)
    log_joint = jax.nn.log_softmax(log_pt + poe_alpha * log_pt_adv, axis=1)
    picked = jnp.take_along_axis(log_joint, targets.reshape(-1, 1), axis=1)
    batch_loss = -picked
    return batch_loss.mean() if size_average else batch_loss.sum()


if __name__ == "__main__":
    key = jax.random.PRNGKey(0)
    k1, k2, k3 = jax.random.split(key, 3)

    B, C = 16, 32  # small synthetic shapes: batch=16, num_classes=32
    inputs = jax.random.normal(k1, (B, C), dtype=jnp.float32)
    inputs_adv = jax.random.normal(k2, (B, C), dtype=jnp.float32)
    targets = jax.random.randint(k3, (B,), 0, C, dtype=jnp.int32)

    # Default config: mean reduction, auto tile (single full-array tile here).
    loss = poe_loss(inputs, targets, inputs_adv, poe_alpha=1.0,
                    size_average=True)
    loss = jax.block_until_ready(loss)
    ref = _poe_loss_ref(inputs, targets, inputs_adv, poe_alpha=1.0,
                        size_average=True)
    assert jnp.allclose(loss, ref, rtol=1e-5, atol=1e-5), (loss, ref)

    # Sum reduction + ragged last tile (B=12 with block_b=8 -> masked tail)
    # + non-unit alpha, to exercise the masking/partial-output path.
    B2 = 12
    loss2 = poe_loss(inputs[:B2], targets[:B2], inputs_adv[:B2],
                     poe_alpha=0.7, size_average=False, block_b=8)
    loss2 = jax.block_until_ready(loss2)
    ref2 = _poe_loss_ref(inputs[:B2], targets[:B2], inputs_adv[:B2],
                         poe_alpha=0.7, size_average=False)
    assert jnp.allclose(loss2, ref2, rtol=1e-5, atol=1e-5), (loss2, ref2)

    print("KERNEL_OK")
</pallas_src>

<mosaic_0001>
module attributes {stable_mosaic.version = 11 : i64} {
  func.func @_poe_loss_kernel(%arg0: i32, %arg1: memref<16x32xf32, #tpu.memory_space<vmem>>, %arg2: memref<16x32xf32, #tpu.memory_space<vmem>>, %arg3: memref<16x1xi32, #tpu.memory_space<vmem>>, %arg4: memref<1x128xf32, #tpu.memory_space<vmem>>) attributes {dimension_semantics = [#tpu.dimension_semantics<parallel>], iteration_bounds = array<i64: 1>, scalar_prefetch = 0 : i64, scratch_operands = 0 : i64, tpu.core_type = #tpu.core_type<tc>, window_params = [{transform_indices = @transform_0, window_bounds = array<i64: 16, 32>}, {transform_indices = @transform_1, window_bounds = array<i64: 16, 32>}, {transform_indices = @transform_2, window_bounds = array<i64: 16, 1>}, {transform_indices = @transform_3, window_bounds = array<i64: 1, 128>}]} {
    %c0 = arith.constant 0 : index
    %c0_0 = arith.constant 0 : index
    %0 = vector.load %arg1[%c0, %c0_0] : memref<16x32xf32, #tpu.memory_space<vmem>>, vector<16x32xf32>
    %c0_1 = arith.constant 0 : index
    %c0_2 = arith.constant 0 : index
    %1 = vector.load %arg2[%c0_1, %c0_2] : memref<16x32xf32, #tpu.memory_space<vmem>>, vector<16x32xf32>
    %c0_3 = arith.constant 0 : index
    %c0_4 = arith.constant 0 : index
    %2 = vector.load %arg3[%c0_3, %c0_4] : memref<16x1xi32, #tpu.memory_space<vmem>>, vector<16x1xi32>
    %cst = arith.constant 1.000000e+00 : f32
    %3 = vector.broadcast %cst : f32 to vector<16x32xf32>
    %4 = arith.mulf %3, %1 : vector<16x32xf32>
    %5 = arith.addf %0, %4 : vector<16x32xf32>
    %cst_5 = arith.constant dense<0xFF800000> : vector<16xf32>
    %6 = vector.multi_reduction <maximumf>, %5, %cst_5 [1] : vector<16x32xf32> to vector<16xf32>
    %7 = vector.shape_cast %6 : vector<16xf32> to vector<16x1xf32>
    %8 = vector.broadcast %7 : vector<16x1xf32> to vector<16x32xf32>
    %9 = arith.subf %5, %8 : vector<16x32xf32>
    %10 = math.exp %9 : vector<16x32xf32>
    %cst_6 = arith.constant dense<0.000000e+00> : vector<16xf32>
    %11 = vector.multi_reduction <add>, %10, %cst_6 [1] : vector<16x32xf32> to vector<16xf32>
    %12 = vector.shape_cast %11 : vector<16xf32> to vector<16x1xf32>
    %13 = math.log %12 : vector<16x1xf32>
    %14 = arith.addf %7, %13 : vector<16x1xf32>
    %15 = tpu.iota {dimensions = array<i32: 1>} : vector<16x32xi32>
    %16 = vector.broadcast %2 : vector<16x1xi32> to vector<16x32xi32>
    %17 = arith.cmpi eq, %15, %16 : vector<16x32xi32>
    %cst_7 = arith.constant 0.000000e+00 : f32
    %18 = vector.broadcast %cst_7 : f32 to vector<16x32xf32>
    %19 = arith.select %17, %5, %18 : vector<16x32xi1>, vector<16x32xf32>
    %cst_8 = arith.constant dense<0.000000e+00> : vector<16xf32>
    %20 = vector.multi_reduction <add>, %19, %cst_8 [1] : vector<16x32xf32> to vector<16xf32>
    %21 = vector.shape_cast %20 : vector<16xf32> to vector<16x1xf32>
    %22 = arith.subf %14, %21 : vector<16x1xf32>
    %23 = tpu.iota {dimensions = array<i32: 0>} : vector<16x1xi32>
    %c16_i32 = arith.constant 16 : i32
    %24 = arith.muli %arg0, %c16_i32 : i32
    %25 = vector.broadcast %24 : i32 to vector<16x1xi32>
    %26 = arith.addi %23, %25 : vector<16x1xi32>
    %c16_i32_9 = arith.constant 16 : i32
    %27 = vector.broadcast %c16_i32_9 : i32 to vector<16x1xi32>
    %28 = arith.cmpi slt, %26, %27 : vector<16x1xi32>
    %cst_10 = arith.constant 0.000000e+00 : f32
    %29 = vector.broadcast %cst_10 : f32 to vector<16x1xf32>
    %30 = arith.select %28, %22, %29 : vector<16x1xi1>, vector<16x1xf32>
    %31 = vector.shape_cast %30 : vector<16x1xf32> to vector<1x16x1xf32>
    %cst_11 = arith.constant dense<0.000000e+00> : vector<1xf32>
    %32 = vector.multi_reduction <add>, %31, %cst_11 [1, 2] : vector<1x16x1xf32> to vector<1xf32>
    %33 = vector.shape_cast %32 : vector<1xf32> to vector<1x1x1xf32>
    %34 = vector.extract %33[0, 0, 0] : f32 from vector<1x1x1xf32>
    %35 = tpu.iota {dimensions = array<i32: 1>} : vector<1x128xi32>
    %c0_i32 = arith.constant 0 : i32
    %36 = vector.broadcast %c0_i32 : i32 to vector<1x128xi32>
    %37 = arith.cmpi eq, %35, %36 : vector<1x128xi32>
    %cst_12 = arith.constant 0.000000e+00 : f32
    %38 = vector.broadcast %34 : f32 to vector<1x128xf32>
    %39 = vector.broadcast %cst_12 : f32 to vector<1x128xf32>
    %40 = arith.select %37, %38, %39 : vector<1x128xi1>, vector<1x128xf32>
    %c0_13 = arith.constant 0 : index
    %c0_14 = arith.constant 0 : index
    %41 = vector.load %arg4[%c0_13, %c0_14] : memref<1x128xf32, #tpu.memory_space<vmem>>, vector<1x128xf32>
    tpu.vector_store %arg4[%c0_13, %c0_14], %40 {strides = array<i32>} : memref<1x128xf32, #tpu.memory_space<vmem>>, vector<1x128xf32>,
    return
  }
  func.func @transform_0(%arg0: i32) -> (i32, i32) {
    %c0_i32 = arith.constant 0 : i32
    %c0_i32_0 = arith.constant 0 : i32
    return %arg0, %c0_i32 : i32, i32
  }
  func.func @transform_1(%arg0: i32) -> (i32, i32) {
    %c0_i32 = arith.constant 0 : i32
    %c0_i32_0 = arith.constant 0 : i32
    return %arg0, %c0_i32 : i32, i32
  }
  func.func @transform_2(%arg0: i32) -> (i32, i32) {
    %c0_i32 = arith.constant 0 : i32
    %c0_i32_0 = arith.constant 0 : i32
    return %arg0, %c0_i32 : i32, i32
  }
  func.func @transform_3(%arg0: i32) -> (i32, i32) {
    %c0_i32 = arith.constant 0 : i32
    %c0_i32_0 = arith.constant 0 : i32
    return %c0_i32, %arg0 : i32, i32
  }
}

</mosaic_0001>

<llo_original>
// kernel: tpu_custom_call.1
$region0: #{tpu_custom_call.1}
  #allocation0 [shape = 'u32[]', space=smem, size = 0x4, offset = 0x4, fixed_abs, tag = 'smem constant byte address 0x4 - core index']
  #allocation1 [shape = 'u32[144,128]{1,0:T(1,128)}', space=vmem, size = 0x12000, scoped, tag = 'internal scratch']
  %s0 = inlined_call_operand.vmem [shape: f32[16,32], index: 0, kind: input, shape index: {}]
  %s1 = inlined_call_operand.hbm [shape: f32[16,32], index: 1, kind: input, shape index: {}]
  %s2 = inlined_call_operand.vmem [shape: s32[16,1], index: 2, kind: input, shape index: {}]
  %s3 = inlined_call_operand.hbm [shape: f32[1,128], index: 3, kind: output, shape index: {}]
  %s4 = sld [smem:[#allocation0]]
  $region26: #{tpu_custom_call.1} parent=0
    _
  %s6 = ssub.s32 1, %s4
  %s7 = scalar_select 0, %s6, %s4
  $region1: #{tpu_custom_call.1} parent=0
    #allocation2 [shape = 'u8[8192]{0}', space=vmem, size = 0x2000, scoped, tag = 'input window, operand 1, single buffered']
    #allocation3 [shape = 's32[1]{0}', space=sflag, size = 0x4, scoped, tag = 'scoped memory for tpu_custom_call.1']
    #allocation4 [shape = 's32[1]{0}', space=sflag, size = 0x4, scoped, tag = 'scoped memory for tpu_custom_call.1']
    #allocation5 [shape = 'u8[512]{0}', space=vmem, size = 0x400, scoped, tag = 'output window, operand 0, single buffered']
    %8 = vsyncpa [#allocation3], 0
    %9 = vsyncpa [#allocation4], 0
    // Predicated region
    $region2: #{tpu_custom_call.1} parent=1 // pred_check
      _
    $region3: #{tpu_custom_call.1} parent=1 // pred_check_branch
      %11 = sbr.rel (0) target = $region5
    $region4: #{tpu_custom_call.1} parent=1 // pred_region
      _
    $region5: #{tpu_custom_call.1} parent=1 // pred_fallthru
      _
    // Predicated region
    $region6: #{tpu_custom_call.1} parent=1 // pred_check
      _
    $region7: #{tpu_custom_call.1} parent=1 // pred_check_branch
      %13 = sbr.rel (0) target = $region9
    $region8: #{tpu_custom_call.1} parent=1 // pred_region
      %s15 = ssub.s32 256, 256
      %16 = vsyncadd [#allocation3], %s15
      %s17 = sshll.u32 [#allocation2], 4
      %s18 = int_to_ptr.vmem [resolvable:$true] %s17
      %23 = dma.hbm_to_vmem [thread:$0]  %s1, 256, %s18, [#allocation3], 128, 128, 8
    $region9: #{tpu_custom_call.1} parent=1 // pred_fallthru
      _
    // Predicated region
    $region10: #{tpu_custom_call.1} parent=1 // pred_check
      _
    $region11: #{tpu_custom_call.1} parent=1 // pred_check_branch
      %25 = sbr.rel (0) target = $region13
    $region12: #{tpu_custom_call.1} parent=1 // pred_region
      _
    $region13: #{tpu_custom_call.1} parent=1 // pred_fallthru
      _
    // Predicated region
    $region14: #{tpu_custom_call.1} parent=1 // pred_check
      _
    $region15: #{tpu_custom_call.1} parent=1 // pred_check_branch
      %27 = sbr.rel (0) target = $region17
    $region16: #{tpu_custom_call.1} parent=1 // pred_region
      %28 = dma.done [#allocation3], 256
    $region17: #{tpu_custom_call.1} parent=1 // pred_fallthru
      _
    %v29 = vld [vmem:[%s0] sm:$0xff]
    %v30 = vld [vmem:[%s0 + $0x8] sm:$0xff]
    %v31 = vld [vmem:[#allocation2] sm:$0xff]
    %v32 = vld [vmem:[#allocation2 + $0x8] sm:$0xff]
    %v33 = vld [vmem:[%s2] sm:$0xff]
    %v34 = vld [vmem:[%s2 + $0x8] sm:$0xff]
    %v35 = vadd.f32 %v29, %v31
    %v36 = vadd.f32 %v30, %v32
    %vm37 = vcmask 261120
    %v38 = vsel %vm37, %v35, -inf
    %39 = vmax.xlane.f32.xlu0 %v38
    %v40 = vpop.xlane.xlu0 %39
    %v41 = vsel %vm37, %v36, -inf
    %42 = vmax.xlane.f32.xlu0 %v41
    %v43 = vpop.xlane.xlu0 %42
    %v44 = vsub.f32 %v35, %v40
    %v45 = vsub.f32 %v36, %v43
    %v46 = vmul.f32 %v44, 1.442695
    %v47 = vpow.pop %v46
    %v48 = vmul.f32 %v45, 1.442695
    %v49 = vpow.pop %v48
    %v50 = vsel %vm37, %v47, 0.0
    %51 = vadd.xlane.f32.xlu0 %v50
    %v52 = vpop.xlane.xlu0 %51
    %v53 = vsel %vm37, %v49, 0.0
    %54 = vadd.xlane.f32.xlu0 %v53
    %v55 = vpop.xlane.xlu0 %54
    %v56 = vlog2.pop %v52
    %v57 = vmul.f32 %v56, 0.6931472
    %v58 = vlog2.pop %v55
    %v59 = vmul.f32 %v58, 0.6931472
    %v60 = vadd.f32 %v40, %v57
    %v61 = vadd.f32 %v43, %v59
    %v62 = vlaneseq
    %v63 = vand.u32 %v62, 127
    %64 = vset.pattern.permute.xlu0 0
    %65 = vperm.xlu0 %64, %v33
    %v66 = vpop.permute.xlu0 %65
    %67 = vset.pattern.permute.xlu0 0
    %68 = vperm.xlu0 %67, %v34
    %v69 = vpop.permute.xlu0 %68
    %vm70 = vcmp.eq.s32.totalorder %v63, %v66
    %vm71 = vcmp.eq.s32.totalorder %v63, %v69
    %v72 = vsel %vm70, %v35, 0.0
    %v73 = vsel %vm71, %v36, 0.0
    %v74 = vsel %vm37, %v72, 0.0
    %75 = vadd.xlane.f32.xlu0 %v74
    %v76 = vpop.xlane.xlu0 %75
    %v77 = vsel %vm37, %v73, 0.0
    %78 = vadd.xlane.f32.xlu0 %v77
    %v79 = vpop.xlane.xlu0 %78
    %v80 = vsub.f32 %v60, %v76
    %v81 = vsub.f32 %v61, %v79
    %v82 = vlaneseq
    %v83 = vshrl.u32 %v82, 7
    %v84 = vadd.s32 %v83, 8
    %s85 = smul.u32 0, 16
    %v86 = vstv %s85
    %v87 = vadd.s32 %v83, %v86
    %v88 = vadd.s32 %v84, %v86
    %vm89 = vcmp.lt.s32.totalorder %v87, 16
    %vm90 = vcmp.lt.s32.totalorder %v88, 16
    %v91 = vsel %vm89, %v80, 0.0
    %v92 = vsel %vm90, %v81, 0.0
    %vm93 = vcmask 7168
    %v94 = vsel %vm93, %v91, 0.0
    %v95 = vsel %vm93, %v92, 0.0
    %v96 = vadd.f32 %v94, %v95
    %97 = vadd.xlane.f32.xlu0 %v96
    %v98 = vpop.xlane.xlu0 %97
    %v99 = vrot.slane %v98, 4
    %v100 = vadd.f32 %v98, %v99
    %v101 = vrot.slane %v100, 2
    %v102 = vadd.f32 %v100, %v101
    %v103 = vrot.slane %v102, 1
    %v104 = vadd.f32 %v102, %v103
    %s105 = vtos %v104
    %vm106 = vcmp.eq.s32.totalorder %v63, 0
    %v107 = vstv %s105
    %v108 = vsel %vm106, %v107, 0.0
    %109 = vst [vmem:[#allocation5] sm:$0x1] %v108
    // Predicated region
    $region18: #{tpu_custom_call.1} parent=1 // pred_check
      _
    $region19: #{tpu_custom_call.1} parent=1 // pred_check_branch
      %111 = sbr.rel (0) target = $region21
    $region20: #{tpu_custom_call.1} parent=1 // pred_region
      %s113 = ssub.s32 16, 16
      %114 = vsyncadd [#allocation4], %s113
      %s116 = sshll.u32 [#allocation5], 4
      %s117 = int_to_ptr.vmem [resolvable:$true] %s116
      %119 = dma.vmem_to_hbm [thread:$0]  %s117, 16, %s3, [#allocation4]
    $region21: #{tpu_custom_call.1} parent=1 // pred_fallthru
      _
    // Predicated region
    $region22: #{tpu_custom_call.1} parent=1 // pred_check
      _
    $region23: #{tpu_custom_call.1} parent=1 // pred_check_branch
      %121 = sbr.rel (0) target = $region25
    $region24: #{tpu_custom_call.1} parent=1 // pred_region
      %122 = dma.done [#allocation4], 16
    $region25: #{tpu_custom_call.1} parent=1 // pred_fallthru
      _
    %123 = vsyncpa [#allocation3], 1
    %124 = vsyncpa [#allocation4], 1

</llo_original>
